<compile_context>
chip_gen: v6e
topology: v6e:2x2x1
jax: 0.10.0
libtpu: 0.0.40
codegen_flags: <defaults>
</compile_context>

<pallas_src>
import functools

import jax
import jax.numpy as jnp
import numpy as np
from jax.experimental import pallas as pl
from jax.experimental.pallas import tpu as pltpu

MAX_CH = 2  # max children per node; padded child slots point at the sentinel
            # zero row, so they contribute exactly 0 (matches PyTorch).


# ----------------------------------------------------------------------------
# Fused ChildSum Tree-LSTM + Similarity kernel (single invocation).
# ----------------------------------------------------------------------------
def _tree_lstm_sim_kernel(
    # scalar-prefetch ref (SMEM)
    child_idx_ref,   # (num_nodes*MAX_CH,) int32; padded slots -> num_nodes
    # VMEM tensor inputs
    xn_ref,          # (num_nodes, in_dim)   per-node embedded inputs
    wx_ref,          # (in_dim, 4*mem)       fused [Wioux | Wfx]
    bx_ref,          # (1, 4*mem)            fused [bioux+biouh | bfx+bfh]
    wh_ref,          # (mem, 4*mem)          fused [Wiouh | Wfh]
    whm_ref,         # (mem, hidden)         similarity weight, "mult" half
    wha_ref,         # (mem, hidden)         similarity weight, "abs" half
    bhs_ref,         # (1, hidden)           similarity bias
    # output
    o_ref,           # (1, hidden)
    # scratch
    state_ref,       # (num_nodes+1, 2*mem)  packed [c | h] per node + zero row
    xz_ref,          # (num_nodes, 4*mem)    batched x-path projections
    *,
    mem,
    num_nodes,
):
    # One batched MXU matmul covers the x path for every node.
    xz_ref[...] = (
        jnp.dot(xn_ref[...], wx_ref[...], preferred_element_type=jnp.float32)
        + bx_ref[...])

    # Sentinel zero row: absent / padded children read (c, h) = 0 from here.
    state_ref[pl.ds(num_nodes, 1), :] = jnp.zeros((1, 2 * mem), jnp.float32)

    wh = wh_ref[...]  # hoisted loop-invariant load (mem, 4*mem)

    # Sequential post-order recursion; all node state stays VMEM-resident.
    @pl.loop(0, num_nodes)
    def _(n):
        i0 = child_idx_ref[n * MAX_CH]
        i1 = child_idx_ref[n * MAX_CH + 1]
        s0 = state_ref[pl.ds(i0, 1), :]                 # (1, 2*mem)
        s1 = state_ref[pl.ds(i1, 1), :]
        child = jnp.concatenate([s0, s1], axis=0)       # (MAX_CH, 2*mem)
        child_c = child[:, :mem]
        child_h = child[:, mem:]

        hz = jnp.dot(child_h, wh,
                     preferred_element_type=jnp.float32)   # (MAX_CH, 4*mem)
        xz = xz_ref[pl.ds(n, 1), :]                        # (1, 4*mem)

        # iou = ioux(x) + iouh(sum_k child_h_k)  (sum distributes over matmul)
        iou = xz[:, :3 * mem] + jnp.sum(hz[:, :3 * mem], axis=0, keepdims=True)
        i_g = jax.nn.sigmoid(iou[:, :mem])
        o_g = jax.nn.sigmoid(iou[:, mem:2 * mem])
        u_g = jnp.tanh(iou[:, 2 * mem:])

        # f_k = sigmoid(fh(child_h_k) + fx(x))   (biases pre-summed into xz)
        f = jax.nn.sigmoid(hz[:, 3 * mem:] + xz[:, 3 * mem:])   # (MAX_CH, mem)
        c = i_g * u_g + jnp.sum(f * child_c, axis=0, keepdims=True)  # (1, mem)
        h = o_g * jnp.tanh(c)                                         # (1, mem)

        state_ref[pl.ds(n, 1), :] = jnp.concatenate([c, h], axis=1)

    # Similarity head fused on the root state (root = last node, post-order).
    root = state_ref[pl.ds(num_nodes - 1, 1), :]
    c_r = root[:, :mem]     # tree.state[0]
    h_r = root[:, mem:]     # tree.state[1]
    o_ref[...] = jax.nn.sigmoid(
        jnp.dot(h_r * c_r, whm_ref[...], preferred_element_type=jnp.float32)
        + jnp.dot(jnp.abs(h_r - c_r), wha_ref[...],
                  preferred_element_type=jnp.float32)
        + bhs_ref[...])


# ----------------------------------------------------------------------------
# Full model forward (embedding lookup + param fusion are plain-JAX glue).
# ----------------------------------------------------------------------------
def similarity_tree_lstm_forward(tokens, child_idx, word_idx, params):
    num_nodes = word_idx.shape[0]
    mem = params["wfh"].shape[0]
    hidden = params["wh"].shape[1]

    # Host-side weight fusion (one-time).
    wx = jnp.concatenate([params["wioux"], params["wfx"]], axis=1)   # (in,4m)
    bx = jnp.concatenate([params["bioux"] + params["biouh"],
                          params["bfx"] + params["bfh"]], axis=1)    # (1,4m)
    wh = jnp.concatenate([params["wiouh"], params["wfh"]], axis=1)   # (m,4m)
    whm = params["wh"][:mem]                                         # (m,hid)
    wha = params["wh"][mem:]                                         # (m,hid)

    # Per-node input rows: emb(tokens)[word_idx] == inputs[tree.idx].
    xn = jnp.take(params["emb"], tokens, axis=0)[word_idx]           # (N, in)

    child_idx_flat = child_idx.reshape(-1).astype(jnp.int32)         # (N*2,)

    kernel = functools.partial(
        _tree_lstm_sim_kernel, mem=mem, num_nodes=num_nodes)

    def full(shape):
        return pl.BlockSpec(shape, lambda i, *_: (0,) * len(shape))

    grid_spec = pltpu.PrefetchScalarGridSpec(
        num_scalar_prefetch=1,
        grid=(1,),
        in_specs=[
            full(xn.shape), full(wx.shape), full(bx.shape), full(wh.shape),
            full(whm.shape), full(wha.shape), full(params["bh"].shape),
        ],
        out_specs=pl.BlockSpec((1, hidden), lambda i, *_: (0, 0)),
        scratch_shapes=[
            pltpu.VMEM((num_nodes + 1, 2 * mem), jnp.float32),  # packed [c|h]
            pltpu.VMEM((num_nodes, 4 * mem), jnp.float32),      # x projections
        ],
    )

    return pl.pallas_call(
        kernel,
        grid_spec=grid_spec,
        out_shape=jax.ShapeDtypeStruct((1, hidden), jnp.float32),
        compiler_params=pltpu.CompilerParams(
            dimension_semantics=("arbitrary",)),
    )(child_idx_flat, xn, wx, bx, wh, whm, wha, params["bh"])


# ----------------------------------------------------------------------------
# Pure-JAX reference (mirrors the PyTorch recursion) for a sanity check.
# ----------------------------------------------------------------------------
def reference_forward(tokens, children_list, word_idx, params):
    emb_x = jnp.take(params["emb"], tokens, axis=0)
    mem = params["wfh"].shape[0]
    states = {}
    for n, children in enumerate(children_list):
        if not children:
            child_c = jnp.zeros((1, mem), jnp.float32)
            child_h = jnp.zeros((1, mem), jnp.float32)
        else:
            child_c = jnp.concatenate([states[k][0] for k in children], axis=0)
            child_h = jnp.concatenate([states[k][1] for k in children], axis=0)
        x = emb_x[word_idx[n]][None, :]
        ch_sum = jnp.sum(child_h, axis=0, keepdims=True)
        iou = (x @ params["wioux"] + params["bioux"]
               + ch_sum @ params["wiouh"] + params["biouh"])
        i, o, u = jnp.split(iou, 3, axis=1)
        i, o, u = jax.nn.sigmoid(i), jax.nn.sigmoid(o), jnp.tanh(u)
        f = jax.nn.sigmoid(child_h @ params["wfh"] + params["bfh"]
                           + x @ params["wfx"] + params["bfx"])
        c = i * u + jnp.sum(f * child_c, axis=0, keepdims=True)
        h = o * jnp.tanh(c)
        states[n] = (c, h)
    c_root, h_root = states[len(children_list) - 1]
    vec = jnp.concatenate([h_root * c_root, jnp.abs(h_root - c_root)], axis=1)
    return jax.nn.sigmoid(vec @ params["wh"] + params["bh"])


if __name__ == "__main__":
    # Small, deterministic configuration.
    vocab_size, in_dim, mem_dim, hidden_dim = 50, 32, 32, 32
    seq_len = 7

    key = jax.random.PRNGKey(0)
    ks = jax.random.split(key, 12)

    def rinit(k, shape, scale=0.1):
        return (scale * jax.random.normal(k, shape)).astype(jnp.float32)

    params = {
        "emb":   rinit(ks[0], (vocab_size, in_dim)),
        # Linear weights stored pre-transposed: (in_features, out_features)
        "wioux": rinit(ks[1], (in_dim, 3 * mem_dim)),
        "bioux": rinit(ks[2], (1, 3 * mem_dim)),
        "wiouh": rinit(ks[3], (mem_dim, 3 * mem_dim)),
        "biouh": rinit(ks[4], (1, 3 * mem_dim)),
        "wfx":   rinit(ks[5], (in_dim, mem_dim)),
        "bfx":   rinit(ks[6], (1, mem_dim)),
        "wfh":   rinit(ks[7], (mem_dim, mem_dim)),
        "bfh":   rinit(ks[8], (1, mem_dim)),
        "wh":    rinit(ks[9], (2 * mem_dim, hidden_dim)),
        "bh":    rinit(ks[10], (1, hidden_dim)),
    }

    # Example dependency tree, linearized post-order (children before parent):
    #   leaves 0,1 -> node 2 ; leaf 3 ; nodes 2,3 -> node 4 ; leaf 5 ;
    #   nodes 4,5 -> node 6 (root)
    children_list = [[], [], [0, 1], [], [2, 3], [], [4, 5]]
    num_nodes = len(children_list)
    # Padded / absent child slots point at the sentinel zero row (num_nodes).
    child_idx_np = np.full((num_nodes, MAX_CH), num_nodes, dtype=np.int32)
    for n, ch in enumerate(children_list):
        for k, c in enumerate(ch):
            child_idx_np[n, k] = c
    word_idx_np = np.arange(num_nodes, dtype=np.int32)  # node n reads token n

    tokens = jax.random.randint(ks[11], (seq_len,), 0, vocab_size,
                                dtype=jnp.int32)
    child_idx = jnp.asarray(child_idx_np)
    word_idx = jnp.asarray(word_idx_np)

    out = similarity_tree_lstm_forward(tokens, child_idx, word_idx, params)
    out = jax.block_until_ready(out)

    ref = reference_forward(tokens, children_list, word_idx_np, params)
    np.testing.assert_allclose(np.asarray(out), np.asarray(ref),
                               rtol=1e-4, atol=1e-5)

    print("KERNEL_OK")
</pallas_src>

<mosaic_0001>
module attributes {stable_mosaic.version = 11 : i64} {
  func.func @_tree_lstm_sim_kernel(%arg0: i32, %arg1: memref<14xi32, #tpu.memory_space<smem>>, %arg2: memref<7x32xf32, #tpu.memory_space<vmem>>, %arg3: memref<32x128xf32, #tpu.memory_space<vmem>>, %arg4: memref<1x128xf32, #tpu.memory_space<vmem>>, %arg5: memref<32x128xf32, #tpu.memory_space<vmem>>, %arg6: memref<32x32xf32, #tpu.memory_space<vmem>>, %arg7: memref<32x32xf32, #tpu.memory_space<vmem>>, %arg8: memref<1x32xf32, #tpu.memory_space<vmem>>, %arg9: memref<1x32xf32, #tpu.memory_space<vmem>>, %arg10: memref<8x64xf32, #tpu.memory_space<vmem>>, %arg11: memref<7x128xf32, #tpu.memory_space<vmem>>) attributes {dimension_semantics = [#tpu.dimension_semantics<arbitrary>], iteration_bounds = array<i64: 1>, scalar_prefetch = 1 : i64, scratch_operands = 2 : i64, tpu.core_type = #tpu.core_type<tc>, window_params = [{pipeline_mode = #tpu.pipeline_mode<synchronous>, transform_indices = @transform_0, window_bounds = array<i64: 7, 32>}, {pipeline_mode = #tpu.pipeline_mode<synchronous>, transform_indices = @transform_1, window_bounds = array<i64: 32, 128>}, {pipeline_mode = #tpu.pipeline_mode<synchronous>, transform_indices = @transform_2, window_bounds = array<i64: 1, 128>}, {pipeline_mode = #tpu.pipeline_mode<synchronous>, transform_indices = @transform_3, window_bounds = array<i64: 32, 128>}, {pipeline_mode = #tpu.pipeline_mode<synchronous>, transform_indices = @transform_4, window_bounds = array<i64: 32, 32>}, {pipeline_mode = #tpu.pipeline_mode<synchronous>, transform_indices = @transform_5, window_bounds = array<i64: 32, 32>}, {pipeline_mode = #tpu.pipeline_mode<synchronous>, transform_indices = @transform_6, window_bounds = array<i64: 1, 32>}, {pipeline_mode = #tpu.pipeline_mode<synchronous>, transform_indices = @transform_7, window_bounds = array<i64: 1, 32>}]} {
    %c0 = arith.constant 0 : index
    %c0_0 = arith.constant 0 : index
    %0 = vector.load %arg2[%c0, %c0_0] : memref<7x32xf32, #tpu.memory_space<vmem>>, vector<7x32xf32>
    %c0_1 = arith.constant 0 : index
    %c0_2 = arith.constant 0 : index
    %1 = vector.load %arg3[%c0_1, %c0_2] : memref<32x128xf32, #tpu.memory_space<vmem>>, vector<32x128xf32>
    %cst = arith.constant dense<0.000000e+00> : vector<7x128xf32>
    %2 = tpu.matmul %0, %1, %cst {dimension_numbers = #tpu.dot_dimension_numbers<[1], [0], [0], [1], [0, 0, 1, 1], [], []>} : vector<7x32xf32>, vector<32x128xf32>, vector<7x128xf32> -> vector<7x128xf32>
    %c0_3 = arith.constant 0 : index
    %c0_4 = arith.constant 0 : index
    %3 = vector.load %arg4[%c0_3, %c0_4] : memref<1x128xf32, #tpu.memory_space<vmem>>, vector<1x128xf32>
    %4 = vector.broadcast %3 : vector<1x128xf32> to vector<7x128xf32>
    %5 = arith.addf %2, %4 : vector<7x128xf32>
    %c0_5 = arith.constant 0 : index
    %c0_6 = arith.constant 0 : index
    %6 = vector.load %arg11[%c0_5, %c0_6] : memref<7x128xf32, #tpu.memory_space<vmem>>, vector<7x128xf32>
    tpu.vector_store %arg11[%c0_5, %c0_6], %5 {strides = array<i32>} : memref<7x128xf32, #tpu.memory_space<vmem>>, vector<7x128xf32>,
    %cst_7 = arith.constant 0.000000e+00 : f32
    %7 = vector.broadcast %cst_7 : f32 to vector<1x64xf32>
    %c7 = arith.constant 7 : index
    %c0_8 = arith.constant 0 : index
    %8 = vector.load %arg10[%c7, %c0_8] : memref<8x64xf32, #tpu.memory_space<vmem>>, vector<1x64xf32>
    tpu.vector_store %arg10[%c7, %c0_8], %7 {strides = array<i32>} : memref<8x64xf32, #tpu.memory_space<vmem>>, vector<1x64xf32>,
    %c0_9 = arith.constant 0 : index
    %c0_10 = arith.constant 0 : index
    %9 = vector.load %arg5[%c0_9, %c0_10] : memref<32x128xf32, #tpu.memory_space<vmem>>, vector<32x128xf32>
    %c0_i32 = arith.constant 0 : i32
    %c7_i32 = arith.constant 7 : i32
    %10 = arith.addi %c0_i32, %c7_i32 : i32
    %c1_i32 = arith.constant 1 : i32
    scf.for %arg12 = %c0_i32 to %10 step %c1_i32  : i32 {
      %c1_i32_24 = arith.constant 1 : i32
      %30 = arith.muli %arg12, %c1_i32_24 : i32
      %c0_i32_25 = arith.constant 0 : i32
      %31 = arith.addi %c0_i32_25, %30 : i32
      %c2_i32 = arith.constant 2 : i32
      %32 = arith.muli %31, %c2_i32 : i32
      %33 = arith.index_cast %32 : i32 to index
      %34 = memref.load %arg1[%33] : memref<14xi32, #tpu.memory_space<smem>>
      %c2_i32_26 = arith.constant 2 : i32
      %35 = arith.muli %31, %c2_i32_26 : i32
      %c1_i32_27 = arith.constant 1 : i32
      %36 = arith.addi %35, %c1_i32_27 : i32
      %37 = arith.index_cast %36 : i32 to index
      %38 = memref.load %arg1[%37] : memref<14xi32, #tpu.memory_space<smem>>
      %39 = arith.index_cast %34 : i32 to index
      %c0_28 = arith.constant 0 : index
      %40 = vector.load %arg10[%39, %c0_28] : memref<8x64xf32, #tpu.memory_space<vmem>>, vector<1x64xf32>
      %41 = arith.index_cast %38 : i32 to index
      %c0_29 = arith.constant 0 : index
      %42 = vector.load %arg10[%41, %c0_29] : memref<8x64xf32, #tpu.memory_space<vmem>>, vector<1x64xf32>
      %43 = tpu.concatenate %40, %42 in 0 : vector<1x64xf32>, vector<1x64xf32> -> vector<2x64xf32>
      %44 = vector.extract_strided_slice %43 {offsets = [0, 0], sizes = [2, 32], strides = [1, 1]} : vector<2x64xf32> to vector<2x32xf32>
      %45 = vector.extract_strided_slice %43 {offsets = [0, 32], sizes = [2, 32], strides = [1, 1]} : vector<2x64xf32> to vector<2x32xf32>
      %cst_30 = arith.constant dense<0.000000e+00> : vector<2x128xf32>
      %46 = tpu.matmul %45, %9, %cst_30 {dimension_numbers = #tpu.dot_dimension_numbers<[1], [0], [0], [1], [0, 0, 1, 1], [], []>} : vector<2x32xf32>, vector<32x128xf32>, vector<2x128xf32> -> vector<2x128xf32>
      %47 = arith.index_cast %31 : i32 to index
      %c0_31 = arith.constant 0 : index
      %48 = vector.load %arg11[%47, %c0_31] : memref<7x128xf32, #tpu.memory_space<vmem>>, vector<1x128xf32>
      %49 = vector.extract_strided_slice %48 {offsets = [0, 0], sizes = [1, 96], strides = [1, 1]} : vector<1x128xf32> to vector<1x96xf32>
      %50 = vector.extract_strided_slice %46 {offsets = [0, 0], sizes = [2, 96], strides = [1, 1]} : vector<2x128xf32> to vector<2x96xf32>
      %cst_32 = arith.constant dense<0.000000e+00> : vector<96xf32>
      %51 = vector.multi_reduction <add>, %50, %cst_32 [0] : vector<2x96xf32> to vector<96xf32>
      %52 = vector.shape_cast %51 : vector<96xf32> to vector<1x96xf32>
      %53 = arith.addf %49, %52 : vector<1x96xf32>
      %54 = vector.extract_strided_slice %53 {offsets = [0, 0], sizes = [1, 32], strides = [1, 1]} : vector<1x96xf32> to vector<1x32xf32>
      %55 = arith.negf %54 : vector<1x32xf32>
      %56 = math.exp %55 : vector<1x32xf32>
      %cst_33 = arith.constant 1.000000e+00 : f32
      %57 = vector.broadcast %cst_33 : f32 to vector<1x32xf32>
      %58 = arith.addf %57, %56 : vector<1x32xf32>
      %59 = arith.divf %57, %58 : vector<1x32xf32>
      %60 = vector.extract_strided_slice %53 {offsets = [0, 32], sizes = [1, 32], strides = [1, 1]} : vector<1x96xf32> to vector<1x32xf32>
      %61 = arith.negf %60 : vector<1x32xf32>
      %62 = math.exp %61 : vector<1x32xf32>
      %cst_34 = arith.constant 1.000000e+00 : f32
      %63 = vector.broadcast %cst_34 : f32 to vector<1x32xf32>
      %64 = arith.addf %63, %62 : vector<1x32xf32>
      %65 = arith.divf %63, %64 : vector<1x32xf32>
      %66 = vector.extract_strided_slice %53 {offsets = [0, 64], sizes = [1, 32], strides = [1, 1]} : vector<1x96xf32> to vector<1x32xf32>
      %67 = math.tanh %66 : vector<1x32xf32>
      %68 = vector.extract_strided_slice %46 {offsets = [0, 96], sizes = [2, 32], strides = [1, 1]} : vector<2x128xf32> to vector<2x32xf32>
      %69 = vector.extract_strided_slice %48 {offsets = [0, 96], sizes = [1, 32], strides = [1, 1]} : vector<1x128xf32> to vector<1x32xf32>
      %70 = vector.broadcast %69 : vector<1x32xf32> to vector<2x32xf32>
      %71 = arith.addf %68, %70 : vector<2x32xf32>
      %72 = arith.negf %71 : vector<2x32xf32>
      %73 = math.exp %72 : vector<2x32xf32>
      %cst_35 = arith.constant 1.000000e+00 : f32
      %74 = vector.broadcast %cst_35 : f32 to vector<2x32xf32>
      %75 = arith.addf %74, %73 : vector<2x32xf32>
      %76 = arith.divf %74, %75 : vector<2x32xf32>
      %77 = arith.mulf %59, %67 : vector<1x32xf32>
      %78 = arith.mulf %76, %44 : vector<2x32xf32>
      %cst_36 = arith.constant dense<0.000000e+00> : vector<32xf32>
      %79 = vector.multi_reduction <add>, %78, %cst_36 [0] : vector<2x32xf32> to vector<32xf32>
      %80 = vector.shape_cast %79 : vector<32xf32> to vector<1x32xf32>
      %81 = arith.addf %77, %80 : vector<1x32xf32>
      %82 = math.tanh %81 : vector<1x32xf32>
      %83 = arith.mulf %65, %82 : vector<1x32xf32>
      %84 = tpu.concatenate %81, %83 in 1 : vector<1x32xf32>, vector<1x32xf32> -> vector<1x64xf32>
      %85 = arith.index_cast %31 : i32 to index
      %c0_37 = arith.constant 0 : index
      %86 = vector.load %arg10[%85, %c0_37] : memref<8x64xf32, #tpu.memory_space<vmem>>, vector<1x64xf32>
      tpu.vector_store %arg10[%85, %c0_37], %84 {strides = array<i32>} : memref<8x64xf32, #tpu.memory_space<vmem>>, vector<1x64xf32>,
    }
    %c7_i32_11 = arith.constant 7 : i32
    %c6 = arith.constant 6 : index
    %c0_12 = arith.constant 0 : index
    %11 = vector.load %arg10[%c6, %c0_12] : memref<8x64xf32, #tpu.memory_space<vmem>>, vector<1x64xf32>
    %12 = vector.extract_strided_slice %11 {offsets = [0, 0], sizes = [1, 32], strides = [1, 1]} : vector<1x64xf32> to vector<1x32xf32>
    %13 = vector.extract_strided_slice %11 {offsets = [0, 32], sizes = [1, 32], strides = [1, 1]} : vector<1x64xf32> to vector<1x32xf32>
    %14 = arith.mulf %13, %12 : vector<1x32xf32>
    %c0_13 = arith.constant 0 : index
    %c0_14 = arith.constant 0 : index
    %15 = vector.load %arg6[%c0_13, %c0_14] : memref<32x32xf32, #tpu.memory_space<vmem>>, vector<32x32xf32>
    %cst_15 = arith.constant dense<0.000000e+00> : vector<1x32xf32>
    %16 = tpu.matmul %14, %15, %cst_15 {dimension_numbers = #tpu.dot_dimension_numbers<[1], [0], [0], [1], [0, 0, 1, 1], [], []>} : vector<1x32xf32>, vector<32x32xf32>, vector<1x32xf32> -> vector<1x32xf32>
    %17 = arith.subf %13, %12 : vector<1x32xf32>
    %18 = math.absf %17 : vector<1x32xf32>
    %c0_16 = arith.constant 0 : index
    %c0_17 = arith.constant 0 : index
    %19 = vector.load %arg7[%c0_16, %c0_17] : memref<32x32xf32, #tpu.memory_space<vmem>>, vector<32x32xf32>
    %cst_18 = arith.constant dense<0.000000e+00> : vector<1x32xf32>
    %20 = tpu.matmul %18, %19, %cst_18 {dimension_numbers = #tpu.dot_dimension_numbers<[1], [0], [0], [1], [0, 0, 1, 1], [], []>} : vector<1x32xf32>, vector<32x32xf32>, vector<1x32xf32> -> vector<1x32xf32>
    %21 = arith.addf %16, %20 : vector<1x32xf32>
    %c0_19 = arith.constant 0 : index
    %c0_20 = arith.constant 0 : index
    %22 = vector.load %arg8[%c0_19, %c0_20] : memref<1x32xf32, #tpu.memory_space<vmem>>, vector<1x32xf32>
    %23 = arith.addf %21, %22 : vector<1x32xf32>
    %24 = arith.negf %23 : vector<1x32xf32>
    %25 = math.exp %24 : vector<1x32xf32>
    %cst_21 = arith.constant 1.000000e+00 : f32
    %26 = vector.broadcast %cst_21 : f32 to vector<1x32xf32>
    %27 = arith.addf %26, %25 : vector<1x32xf32>
    %28 = arith.divf %26, %27 : vector<1x32xf32>
    %c0_22 = arith.constant 0 : index
    %c0_23 = arith.constant 0 : index
    %29 = vector.load %arg9[%c0_22, %c0_23] : memref<1x32xf32, #tpu.memory_space<vmem>>, vector<1x32xf32>
    tpu.vector_store %arg9[%c0_22, %c0_23], %28 {strides = array<i32>} : memref<1x32xf32, #tpu.memory_space<vmem>>, vector<1x32xf32>,
    return
  }
  func.func @transform_0(%arg0: i32, %arg1: memref<14xi32, #tpu.memory_space<smem>>) -> (i32, i32) {
    %c0_i32 = arith.constant 0 : i32
    %c0_i32_0 = arith.constant 0 : i32
    %c0_i32_1 = arith.constant 0 : i32
    return %c0_i32, %c0_i32_0 : i32, i32
  }
  func.func @transform_1(%arg0: i32, %arg1: memref<14xi32, #tpu.memory_space<smem>>) -> (i32, i32) {
    %c0_i32 = arith.constant 0 : i32
    %c0_i32_0 = arith.constant 0 : i32
    %c0_i32_1 = arith.constant 0 : i32
    return %c0_i32, %c0_i32_0 : i32, i32
  }
  func.func @transform_2(%arg0: i32, %arg1: memref<14xi32, #tpu.memory_space<smem>>) -> (i32, i32) {
    %c0_i32 = arith.constant 0 : i32
    %c0_i32_0 = arith.constant 0 : i32
    %c0_i32_1 = arith.constant 0 : i32
    return %c0_i32, %c0_i32_0 : i32, i32
  }
  func.func @transform_3(%arg0: i32, %arg1: memref<14xi32, #tpu.memory_space<smem>>) -> (i32, i32) {
    %c0_i32 = arith.constant 0 : i32
    %c0_i32_0 = arith.constant 0 : i32
    %c0_i32_1 = arith.constant 0 : i32
    return %c0_i32, %c0_i32_0 : i32, i32
  }
  func.func @transform_4(%arg0: i32, %arg1: memref<14xi32, #tpu.memory_space<smem>>) -> (i32, i32) {
    %c0_i32 = arith.constant 0 : i32
    %c0_i32_0 = arith.constant 0 : i32
    %c0_i32_1 = arith.constant 0 : i32
    return %c0_i32, %c0_i32_0 : i32, i32
  }
  func.func @transform_5(%arg0: i32, %arg1: memref<14xi32, #tpu.memory_space<smem>>) -> (i32, i32) {
    %c0_i32 = arith.constant 0 : i32
    %c0_i32_0 = arith.constant 0 : i32
    %c0_i32_1 = arith.constant 0 : i32
    return %c0_i32, %c0_i32_0 : i32, i32
  }
  func.func @transform_6(%arg0: i32, %arg1: memref<14xi32, #tpu.memory_space<smem>>) -> (i32, i32) {
    %c0_i32 = arith.constant 0 : i32
    %c0_i32_0 = arith.constant 0 : i32
    %c0_i32_1 = arith.constant 0 : i32
    return %c0_i32, %c0_i32_0 : i32, i32
  }
  func.func @transform_7(%arg0: i32, %arg1: memref<14xi32, #tpu.memory_space<smem>>) -> (i32, i32) {
    %c0_i32 = arith.constant 0 : i32
    %c0_i32_0 = arith.constant 0 : i32
    %c0_i32_1 = arith.constant 0 : i32
    return %c0_i32, %c0_i32_0 : i32, i32
  }
}

</mosaic_0001>

<llo_original>
// kernel: tpu_custom_call.1
$region0: #{tpu_custom_call.1}
  #allocation0 [shape = 'u32[]', space=smem, size = 0x4, offset = 0x4, fixed_abs, tag = 'smem constant byte address 0x4 - core index']
  #allocation1 [shape = 'u32[144,128]{1,0:T(1,128)}', space=vmem, size = 0x12000, scoped, tag = 'internal scratch']
  #allocation2 [shape = 'f32[8,64]{1,0:T(8,128)}', space=vmem, size = 0x1000, scoped, tag = 'scratch operand']
  #allocation3 [shape = 'f32[7,128]{1,0:T(8,128)}', space=vmem, size = 0x1000, scoped, tag = 'scratch operand']
  #allocation4 [shape = 's32[1]{0}', space=sflag, size = 0x4, scoped, tag = 'scoped memory for tpu_custom_call.1']
  #allocation5 [shape = 'u8[512]{0}', space=smem, size = 0x200, scoped, tag = 'prefetched SMEM operand 0']
  %s0 = inlined_call_operand.hbm [shape: s32[14], index: 0, kind: input, shape index: {}]
  %s1 = inlined_call_operand.hbm [shape: f32[7,32], index: 1, kind: input, shape index: {}]
  %s2 = inlined_call_operand.hbm [shape: f32[32,128], index: 2, kind: input, shape index: {}]
  %s3 = inlined_call_operand.vmem [shape: f32[1,128], index: 3, kind: input, shape index: {}]
  %s4 = inlined_call_operand.hbm [shape: f32[32,128], index: 4, kind: input, shape index: {}]
  %s5 = inlined_call_operand.hbm [shape: f32[32,32], index: 5, kind: input, shape index: {}]
  %s6 = inlined_call_operand.hbm [shape: f32[32,32], index: 6, kind: input, shape index: {}]
  %s7 = inlined_call_operand.vmem [shape: f32[1,32], index: 7, kind: input, shape index: {}]
  %s8 = inlined_call_operand.hbm [shape: f32[1,32], index: 8, kind: output, shape index: {}]
  %s9 = sld [smem:[#allocation0]]
  $region65: #{tpu_custom_call.1} parent=0
    _
  %s11 = ssub.s32 1, %s9
  %s12 = scalar_select 0, %s11, %s9
  %14 = dma.hbm_to_smem %s0, 16, [#allocation5], [#allocation4]
  %15 = dma.done [#allocation4], 16
  %16 = sfence
  $region1: #{tpu_custom_call.1} parent=0
    #allocation6 [shape = 'u8[4096]{0}', space=vmem, size = 0x1000, scoped, tag = 'input window, operand 1, single buffered']
    #allocation7 [shape = 's32[1]{0}', space=sflag, size = 0x4, scoped, tag = 'scoped memory for tpu_custom_call.1']
    #allocation8 [shape = 's32[1]{0}', space=sflag, size = 0x4, scoped, tag = 'scoped memory for tpu_custom_call.1']
    #allocation9 [shape = 'u8[16384]{0}', space=vmem, size = 0x4000, scoped, tag = 'input window, operand 2, single buffered']
    #allocation10 [shape = 's32[1]{0}', space=sflag, size = 0x4, scoped, tag = 'scoped memory for tpu_custom_call.1']
    #allocation11 [shape = 'u8[16384]{0}', space=vmem, size = 0x4000, scoped, tag = 'input window, operand 4, single buffered']
    #allocation12 [shape = 'u8[16384]{0}', space=vmem, size = 0x4000, scoped, tag = 'input window, operand 5, single buffered']
    #allocation13 [shape = 's32[1]{0}', space=sflag, size = 0x4, scoped, tag = 'scoped memory for tpu_custom_call.1']
    #allocation14 [shape = 'u8[16384]{0}', space=vmem, size = 0x4000, scoped, tag = 'input window, operand 6, single buffered']
    #allocation15 [shape = 'u8[512]{0}', space=vmem, size = 0x400, scoped, tag = 'output window, operand 0, single buffered']
    %17 = vsyncpa [#allocation7], 0
    %18 = vsyncpa [#allocation10], 0
    %19 = vsyncpa [#allocation13], 0
    %20 = vsyncpa [#allocation8], 0
    // Predicated region
    $region2: #{tpu_custom_call.1} parent=1 // pred_check
      _
    $region3: #{tpu_custom_call.1} parent=1 // pred_check_branch
      %22 = sbr.rel (0) target = $region5
    $region4: #{tpu_custom_call.1} parent=1 // pred_region
      %s24 = ssub.s32 128, 128
      %25 = vsyncadd [#allocation7], %s24
      %s27 = sshll.u32 [#allocation6], 4
      %s28 = int_to_ptr.vmem [resolvable:$true] %s27
      %30 = dma.hbm_to_vmem [thread:$0]  %s1, 128, %s28, [#allocation7]
    $region5: #{tpu_custom_call.1} parent=1 // pred_fallthru
      _
    // Predicated region
    $region6: #{tpu_custom_call.1} parent=1 // pred_check
      _
    $region7: #{tpu_custom_call.1} parent=1 // pred_check_branch
      %32 = sbr.rel (0) target = $region9
    $region8: #{tpu_custom_call.1} parent=1 // pred_region
      %s34 = ssub.s32 512, 512
      %35 = vsyncadd [#allocation10], %s34
      %s36 = sshll.u32 [#allocation9], 4
      %s37 = int_to_ptr.vmem [resolvable:$true] %s36
      %42 = dma.hbm_to_vmem [thread:$0]  %s2, 512, %s37, [#allocation10], 128, 128, 8
    $region9: #{tpu_custom_call.1} parent=1 // pred_fallthru
      _
    // Predicated region
    $region10: #{tpu_custom_call.1} parent=1 // pred_check
      _
    $region11: #{tpu_custom_call.1} parent=1 // pred_check_branch
      %44 = sbr.rel (0) target = $region13
    $region12: #{tpu_custom_call.1} parent=1 // pred_region
      _
    $region13: #{tpu_custom_call.1} parent=1 // pred_fallthru
      _
    // Predicated region
    $region14: #{tpu_custom_call.1} parent=1 // pred_check
      _
    $region15: #{tpu_custom_call.1} parent=1 // pred_check_branch
      %46 = sbr.rel (0) target = $region17
    $region16: #{tpu_custom_call.1} parent=1 // pred_region
      %s48 = ssub.s32 512, 512
      %49 = vsyncadd [#allocation10], %s48
      %s50 = sshll.u32 [#allocation11], 4
      %s51 = int_to_ptr.vmem [resolvable:$true] %s50
      %56 = dma.hbm_to_vmem [thread:$0]  %s4, 512, %s51, [#allocation10], 128, 128, 8
    $region17: #{tpu_custom_call.1} parent=1 // pred_fallthru
      _
    // Predicated region
    $region18: #{tpu_custom_call.1} parent=1 // pred_check
      _
    $region19: #{tpu_custom_call.1} parent=1 // pred_check_branch
      %58 = sbr.rel (0) target = $region21
    $region20: #{tpu_custom_call.1} parent=1 // pred_region
      %s60 = ssub.s32 512, 512
      %61 = vsyncadd [#allocation13], %s60
      %s62 = sshll.u32 [#allocation12], 4
      %s63 = int_to_ptr.vmem [resolvable:$true] %s62
      %68 = dma.hbm_to_vmem [thread:$0]  %s5, 512, %s63, [#allocation13], 128, 128, 8
    $region21: #{tpu_custom_call.1} parent=1 // pred_fallthru
      _
    // Predicated region
    $region22: #{tpu_custom_call.1} parent=1 // pred_check
      _
    $region23: #{tpu_custom_call.1} parent=1 // pred_check_branch
      %70 = sbr.rel (0) target = $region25
    $region24: #{tpu_custom_call.1} parent=1 // pred_region
      %s72 = ssub.s32 512, 512
      %73 = vsyncadd [#allocation13], %s72
      %s74 = sshll.u32 [#allocation14], 4
      %s75 = int_to_ptr.vmem [resolvable:$true] %s74
      %80 = dma.hbm_to_vmem [thread:$0]  %s6, 512, %s75, [#allocation13], 128, 128, 8
    $region25: #{tpu_custom_call.1} parent=1 // pred_fallthru
      _
    // Predicated region
    $region26: #{tpu_custom_call.1} parent=1 // pred_check
      _
    $region27: #{tpu_custom_call.1} parent=1 // pred_check_branch
      %82 = sbr.rel (0) target = $region29
    $region28: #{tpu_custom_call.1} parent=1 // pred_region
      _
    $region29: #{tpu_custom_call.1} parent=1 // pred_fallthru
      _
    // Predicated region
    $region30: #{tpu_custom_call.1} parent=1 // pred_check
      _
    $region31: #{tpu_custom_call.1} parent=1 // pred_check_branch
      %84 = sbr.rel (0) target = $region33
    $region32: #{tpu_custom_call.1} parent=1 // pred_region
      %85 = dma.done [#allocation7], 128
    $region33: #{tpu_custom_call.1} parent=1 // pred_fallthru
      _
    // Predicated region
    $region34: #{tpu_custom_call.1} parent=1 // pred_check
      _
    $region35: #{tpu_custom_call.1} parent=1 // pred_check_branch
      %87 = sbr.rel (0) target = $region37
    $region36: #{tpu_custom_call.1} parent=1 // pred_region
      %88 = dma.done [#allocation10], 512
    $region37: #{tpu_custom_call.1} parent=1 // pred_fallthru
      _
    // Predicated region
    $region38: #{tpu_custom_call.1} parent=1 // pred_check
      _
    $region39: #{tpu_custom_call.1} parent=1 // pred_check_branch
      %90 = sbr.rel (0) target = $region41
    $region40: #{tpu_custom_call.1} parent=1 // pred_region
      %91 = dma.done [#allocation10], 512
    $region41: #{tpu_custom_call.1} parent=1 // pred_fallthru
      _
    // Predicated region
    $region42: #{tpu_custom_call.1} parent=1 // pred_check
      _
    $region43: #{tpu_custom_call.1} parent=1 // pred_check_branch
      %93 = sbr.rel (0) target = $region45
    $region44: #{tpu_custom_call.1} parent=1 // pred_region
      %94 = dma.done [#allocation13], 512
    $region45: #{tpu_custom_call.1} parent=1 // pred_fallthru
      _
    // Predicated region
    $region46: #{tpu_custom_call.1} parent=1 // pred_check
      _
    $region47: #{tpu_custom_call.1} parent=1 // pred_check_branch
      %96 = sbr.rel (0) target = $region49
    $region48: #{tpu_custom_call.1} parent=1 // pred_region
      %97 = dma.done [#allocation13], 512
    $region49: #{tpu_custom_call.1} parent=1 // pred_fallthru
      _
    %v98 = vld [vmem:[#allocation6] sm:$0x7f]
    %v99 = vld [vmem:[#allocation9] sm:$0xff]
    %v100 = vld [vmem:[#allocation9 + $0x8] sm:$0xff]
    %v101 = vld [vmem:[#allocation9 + $0x10] sm:$0xff]
    %v102 = vld [vmem:[#allocation9 + $0x18] sm:$0xff]
    %v103 = vld [vmem:[%s3] sm:$0x1]
    %v105 = vlaneseq
    %v106 = vshrl.u32 %v105, 7
    %v107 = vsub.s32 0, %v106
    %v108 = vrot.slane %v103, %v107
    %vm110 = vcmask 261120
    %v112 = vsel %vm110, %v98, 0
    %114 = vmatprep.subr.mxu0 0.0
    %115 = vmatpush1.msra.mxu0 0.0
    %116 = vmatprep.subr.mxu0 0.0
    %117 = vmatpush1.msra.mxu0 0.0
    %118 = vmatprep.subr.mxu0 0.0
    %119 = vmatpush1.msra.mxu0 0.0
    %120 = vmatprep.subr.mxu0 0.0
    %121 = vmatpush1.msra.mxu0 0.0
    %122 = vmatprep.subr.mxu0 0.0
    %123 = vmatpush1.msra.mxu0 0.0
    %124 = vmatprep.subr.mxu0 0.0
    %125 = vmatpush1.msra.mxu0 0.0
    %126 = vmatprep.subr.mxu0 0.0
    %127 = vmatpush1.msra.mxu0 0.0
    %128 = vmatprep.subr.mxu0 0.0
    %129 = vmatpush1.msra.mxu0 0.0
    %130 = vmatprep.subr.mxu0 0.0
    %131 = vmatpush1.msra.mxu0 0.0
    %132 = vmatprep.subr.mxu0 0.0
    %133 = vmatpush1.msra.mxu0 0.0
    %134 = vmatprep.subr.mxu0 0.0
    %135 = vmatpush1.msra.mxu0 0.0
    %136 = vmatprep.subr.mxu0 0.0
    %137 = vmatpush1.msra.mxu0 0.0
    %138 = vmatprep.subr.mxu0 0.0
    %139 = vmatpush1.msra.mxu0 %v102
    %140 = vmatprep.subr.mxu0 0.0
    %141 = vmatpush1.msra.mxu0 %v101
    %142 = vmatprep.subr.mxu0 0.0
    %143 = vmatpush1.msra.mxu0 %v100
    %144 = vmatprep.subr.mxu0 0.0
    %145 = vmatpush1.msra.mxu0 %v99
    %146 = vmatprep.subr.mxu0 0.0
    %147 = vmatpush2.msra.mxu0 0.0
    %148 = vmatprep.subr.mxu0 0.0
    %149 = vmatpush2.msra.mxu0 0.0
    %150 = vmatprep.subr.mxu0 0.0
    %151 = vmatpush2.msra.mxu0 0.0
    %152 = vmatprep.subr.mxu0 0.0
    %153 = vmatpush2.msra.mxu0 0.0
    %154 = vmatprep.subr.mxu0 0.0
    %155 = vmatpush2.msra.mxu0 0.0
    %156 = vmatprep.subr.mxu0 0.0
    %157 = vmatpush2.msra.mxu0 0.0
    %158 = vmatprep.subr.mxu0 0.0
    %159 = vmatpush2.msra.mxu0 0.0
    %160 = vmatprep.subr.mxu0 0.0
    %161 = vmatpush2.msra.mxu0 0.0
    %162 = vmatprep.subr.mxu0 0.0
    %163 = vmatpush2.msra.mxu0 0.0
    %164 = vmatprep.subr.mxu0 0.0
    %165 = vmatpush2.msra.mxu0 0.0
    %166 = vmatprep.subr.mxu0 0.0
    %167 = vmatpush2.msra.mxu0 0.0
    %168 = vmatprep.subr.mxu0 0.0
    %169 = vmatpush2.msra.mxu0 0.0
    %170 = vmatprep.subr.mxu0 0.0
    %171 = vmatpush2.msra.mxu0 0.0
    %172 = vmatprep.subr.mxu0 0.0
    %173 = vmatpush2.msra.mxu0 0.0
    %174 = vmatprep.subr.mxu0 0.0
    %175 = vmatpush2.msra.mxu0 0.0
    %176 = vmatprep.subr.mxu0 0.0
    %177 = vmatpush2.msra.mxu0 0.0
    %178 = vmatprep.mubr.f32.mxu0 0.0
    %179 = vmatmul.mubr.f32.gmra.mxu0 %v112
    %v180 = vpop.f32.mrf.mxu0
    %v181 = vadd.f32 %v108, %v180
    %v182 = vpop.f32.mrf.mxu0
    %183 = vdwg.mxu0
    %184 = vst [vmem:[#allocation3] sm:$0x7f] %v181
    %vm185 = vcmask 516096
    %186 = vst.msk [vmem:[#allocation2 + $0x7] sm:$0x1] %vm185, 0.0
    %v187 = vld [vmem:[#allocation11] sm:$0xff]
    %v188 = vld [vmem:[#allocation11 + $0x8] sm:$0xff]
    %v189 = vld [vmem:[#allocation11 + $0x10] sm:$0xff]
    %v190 = vld [vmem:[#allocation11 + $0x18] sm:$0xff]
    loop: start=0, step=1, limit=7
    $region50: #{tpu_custom_call.1} parent=1 // loop_pre_header
      _
    $region51: #{tpu_custom_call.1} parent=1 // loop_header
      %s192 = sphi 0, %s196
      %p193 = scmp.ge.s32.totalorder %s192, 7
    $region52: #{tpu_custom_call.1} parent=1 // loop_header_branch
      %195 = sbr.rel (%p193) target = $region56
    $region53: #{tpu_custom_call.1} parent=1 // loop_body
      %s197 = smul.u32 %s192, 2
      %s198 = sld [smem:[#allocation5 + %s197]]
      %s199 = sadd.s32 %s197, 1
      %s200 = sld [smem:[#allocation5 + %s199]]
      %s201 = scalar_lea.vmem [#allocation2], %s198
      %v202 = vld [vmem:[%s201] sm:$0x1]
      %s203 = scalar_lea.vmem [#allocation2], %s200
      %v204 = vld [vmem:[%s203] sm:$0x1]
      %v206 = vrot.slane %v204, 7
      %vm208 = vcmask 1040384
      %v209 = vsel %vm208, %v202, %v206
      %211 = vrot.lane.b32.xlu0 %v209, 96
      %v212 = vpop.permute.xlu0 %211
      %v213 = vsel %vm110, %v212, 0
      %215 = vmatprep.subr.mxu0 0.0
      %216 = vmatpush1.msra.mxu0 0.0
      %217 = vmatprep.subr.mxu0 0.0
      %218 = vmatpush1.msra.mxu0 0.0
      %219 = vmatprep.subr.mxu0 0.0
      %220 = vmatpush1.msra.mxu0 0.0
      %221 = vmatprep.subr.mxu0 0.0
      %222 = vmatpush1.msra.mxu0 0.0
      %223 = vmatprep.subr.mxu0 0.0
      %224 = vmatpush1.msra.mxu0 0.0
      %225 = vmatprep.subr.mxu0 0.0
      %226 = vmatpush1.msra.mxu0 0.0
      %227 = vmatprep.subr.mxu0 0.0
      %228 = vmatpush1.msra.mxu0 0.0
      %229 = vmatprep.subr.mxu0 0.0
      %230 = vmatpush1.msra.mxu0 0.0
      %231 = vmatprep.subr.mxu0 0.0
      %232 = vmatpush1.msra.mxu0 0.0
      %233 = vmatprep.subr.mxu0 0.0
      %234 = vmatpush1.msra.mxu0 0.0
      %235 = vmatprep.subr.mxu0 0.0
      %236 = vmatpush1.msra.mxu0 0.0
      %237 = vmatprep.subr.mxu0 0.0
      %238 = vmatpush1.msra.mxu0 0.0
      %239 = vmatprep.subr.mxu0 0.0
      %240 = vmatpush1.msra.mxu0 %v190
      %241 = vmatprep.subr.mxu0 0.0
      %242 = vmatpush1.msra.mxu0 %v189
      %243 = vmatprep.subr.mxu0 0.0
      %244 = vmatpush1.msra.mxu0 %v188
      %245 = vmatprep.subr.mxu0 0.0
      %246 = vmatpush1.msra.mxu0 %v187
      %247 = vmatprep.subr.mxu0 0.0
      %248 = vmatpush2.msra.mxu0 0.0
      %249 = vmatprep.subr.mxu0 0.0
      %250 = vmatpush2.msra.mxu0 0.0
      %251 = vmatprep.subr.mxu0 0.0
      %252 = vmatpush2.msra.mxu0 0.0
      %253 = vmatprep.subr.mxu0 0.0
      %254 = vmatpush2.msra.mxu0 0.0
      %255 = vmatprep.subr.mxu0 0.0
      %256 = vmatpush2.msra.mxu0 0.0
      %257 = vmatprep.subr.mxu0 0.0
      %258 = vmatpush2.msra.mxu0 0.0
      %259 = vmatprep.subr.mxu0 0.0
      %260 = vmatpush2.msra.mxu0 0.0
      %261 = vmatprep.subr.mxu0 0.0
      %262 = vmatpush2.msra.mxu0 0.0
      %263 = vmatprep.subr.mxu0 0.0
      %264 = vmatpush2.msra.mxu0 0.0
      %265 = vmatprep.subr.mxu0 0.0
      %266 = vmatpush2.msra.mxu0 0.0
      %267 = vmatprep.subr.mxu0 0.0
      %268 = vmatpush2.msra.mxu0 0.0
      %269 = vmatprep.subr.mxu0 0.0
      %270 = vmatpush2.msra.mxu0 0.0
      %271 = vmatprep.subr.mxu0 0.0
      %272 = vmatpush2.msra.mxu0 0.0
      %273 = vmatprep.subr.mxu0 0.0
      %274 = vmatpush2.msra.mxu0 0.0
      %275 = vmatprep.subr.mxu0 0.0
      %276 = vmatpush2.msra.mxu0 0.0
      %277 = vmatprep.subr.mxu0 0.0
      %278 = vmatpush2.msra.mxu0 0.0
      %279 = vmatprep.mubr.f32.mxu0 0.0
      %280 = vmatmul.mubr.f32.gmra.mxu0 %v213
      %v281 = vpop.f32.mrf.mxu0
      %v282 = vadd.f32 0.0, %v281
      %v283 = vpop.f32.mrf.mxu0
      %284 = vdwg.mxu0
      %s285 = scalar_lea.vmem [#allocation3], %s192
      %v286 = vld [vmem:[%s285] sm:$0x1]
      %vm287 = vcmask 779264
      %v288 = vsel %vm287, %v282, 0.0
      %v289 = vrot.slane %v288, 4
      %v290 = vadd.f32 %v288, %v289
      %v291 = vrot.slane %v290, 2
      %v292 = vadd.f32 %v290, %v291
      %v293 = vrot.slane %v292, 1
      %v294 = vadd.f32 %v292, %v293
      %v295 = vadd.f32 %v286, %v294
      %v296 = vxor.u32 %v295, 2147483648
      %v297 = vmul.f32 %v296, 1.442695
      %v298 = vpow.pop %v297
      %v299 = vadd.f32 %v298, 1.0
      %v300 = vrcp.pop %v299
      %v301 = vmul.f32 1.0, %v300
      %v302 = vtanh.pop %v295
      %v303 = vlaneseq
      %v304 = vshrl.u32 %v303, 7
      %v305 = vsub.s32 0, %v304
      %v306 = vrot.slane %v286, %v305
      %v307 = vadd.f32 %v282, %v306
      %v308 = vxor.u32 %v307, 2147483648
      %v309 = vmul.f32 %v308, 1.442695
      %v310 = vpow.pop %v309
      %v311 = vadd.f32 %v310, 1.0
      %v312 = vrcp.pop %v311
      %v313 = vmul.f32 1.0, %v312
      %315 = vrot.lane.b32.xlu0 %v302, 64
      %v316 = vpop.permute.xlu0 %315
      %v318 = vmul.f32 %v301, %v316
      %v320 = vmul.f32 %v313, %v212
      %vm321 = vcmask 1042176
      %v322 = vsel %vm321, %v320, 0.0
      %v323 = vrot.slane %v322, 4
      %v324 = vadd.f32 %v322, %v323
      %v325 = vrot.slane %v324, 2
      %v326 = vadd.f32 %v324, %v325
      %v327 = vrot.slane %v326, 1
      %v328 = vadd.f32 %v326, %v327
      %330 = vrot.lane.b32.xlu0 %v328, 32
      %v331 = vpop.permute.xlu0 %330
      %v333 = vadd.f32 %v318, %v331
      %v334 = vtanh.pop %v333
      %336 = vrot.lane.b32.xlu0 %v334, 32
      %v337 = vpop.permute.xlu0 %336
      %v339 = vmul.f32 %v301, %v337
      %v340 = vsel %vm110, %v333, %v339
      %s341 = scalar_lea.vmem [#allocation2], %s192
      %342 = vst.msk [vmem:[%s341] sm:$0x1] %vm185, %v340
    $region54: #{tpu_custom_call.1} parent=1 // loop_footer
      %s196 = sadd.s32 1, %s192
    $region55: #{tpu_custom_call.1} parent=1 // loop_footer_branch
      %191 = sbr.rel target = $region51
    $region56: #{tpu_custom_call.1} parent=1 // loop_exit
      _
    %v343 = vld [vmem:[#allocation2 + $0x6] sm:$0x1]
    %345 = vrot.lane.b32.xlu0 %v343, 32
    %v346 = vpop.permute.xlu0 %345
    %v348 = vmul.f32 %v343, %v346
    %v349 = vld [vmem:[#allocation12] sm:$0xff]
    %v350 = vld [vmem:[#allocation12 + $0x8] sm:$0xff]
    %v351 = vld [vmem:[#allocation12 + $0x10] sm:$0xff]
    %v352 = vld [vmem:[#allocation12 + $0x18] sm:$0xff]
    %v353 = vsub.f32 %v343, %v346
    %v354 = vand.u32 2147483647, %v353
    %v355 = vld [vmem:[#allocation14] sm:$0xff]
    %v356 = vld [vmem:[#allocation14 + $0x8] sm:$0xff]
    %v357 = vld [vmem:[#allocation14 + $0x10] sm:$0xff]
    %v358 = vld [vmem:[#allocation14 + $0x18] sm:$0xff]
    %360 = vrot.lane.b32.xlu0 %v354, 96
    %v361 = vpop.permute.xlu0 %360
    %v362 = vsel %vm110, %v361, 0
    %364 = vmatprep.subr.mxu0 0.0
    %365 = vmatpush1.msra.mxu0 0.0
    %366 = vmatprep.subr.mxu0 0.0
    %367 = vmatpush1.msra.mxu0 0.0
    %368 = vmatprep.subr.mxu0 0.0
    %369 = vmatpush1.msra.mxu0 0.0
    %370 = vmatprep.subr.mxu0 0.0
    %371 = vmatpush1.msra.mxu0 0.0
    %372 = vmatprep.subr.mxu0 0.0
    %373 = vmatpush1.msra.mxu0 0.0
    %374 = vmatprep.subr.mxu0 0.0
    %375 = vmatpush1.msra.mxu0 0.0
    %376 = vmatprep.subr.mxu0 0.0
    %377 = vmatpush1.msra.mxu0 0.0
    %378 = vmatprep.subr.mxu0 0.0
    %379 = vmatpush1.msra.mxu0 0.0
    %380 = vmatprep.subr.mxu0 0.0
    %381 = vmatpush1.msra.mxu0 0.0
    %382 = vmatprep.subr.mxu0 0.0
    %383 = vmatpush1.msra.mxu0 0.0
    %384 = vmatprep.subr.mxu0 0.0
    %385 = vmatpush1.msra.mxu0 0.0
    %386 = vmatprep.subr.mxu0 0.0
    %387 = vmatpush1.msra.mxu0 0.0
    %388 = vmatprep.subr.mxu0 0.0
    %389 = vmatpush1.msra.mxu0 %v358
    %390 = vmatprep.subr.mxu0 0.0
    %391 = vmatpush1.msra.mxu0 %v357
    %392 = vmatprep.subr.mxu0 0.0
    %393 = vmatpush1.msra.mxu0 %v356
    %394 = vmatprep.subr.mxu0 0.0
    %395 = vmatpush1.msra.mxu0 %v355
    %396 = vmatprep.subr.mxu0 0.0
    %397 = vmatpush2.msra.mxu0 0.0
    %398 = vmatprep.subr.mxu0 0.0
    %399 = vmatpush2.msra.mxu0 0.0
    %400 = vmatprep.subr.mxu0 0.0
    %401 = vmatpush2.msra.mxu0 0.0
    %402 = vmatprep.subr.mxu0 0.0
    %403 = vmatpush2.msra.mxu0 0.0
    %404 = vmatprep.subr.mxu0 0.0
    %405 = vmatpush2.msra.mxu0 0.0
    %406 = vmatprep.subr.mxu0 0.0
    %407 = vmatpush2.msra.mxu0 0.0
    %408 = vmatprep.subr.mxu0 0.0
    %409 = vmatpush2.msra.mxu0 0.0
    %410 = vmatprep.subr.mxu0 0.0
    %411 = vmatpush2.msra.mxu0 0.0
    %412 = vmatprep.subr.mxu0 0.0
    %413 = vmatpush2.msra.mxu0 0.0
    %414 = vmatprep.subr.mxu0 0.0
    %415 = vmatpush2.msra.mxu0 0.0
    %416 = vmatprep.subr.mxu0 0.0
    %417 = vmatpush2.msra.mxu0 0.0
    %418 = vmatprep.subr.mxu0 0.0
    %419 = vmatpush2.msra.mxu0 0.0
    %420 = vmatprep.subr.mxu0 0.0
    %421 = vmatpush2.msra.mxu0 0.0
    %422 = vmatprep.subr.mxu0 0.0
    %423 = vmatpush2.msra.mxu0 0.0
    %424 = vmatprep.subr.mxu0 0.0
    %425 = vmatpush2.msra.mxu0 0.0
    %426 = vmatprep.subr.mxu0 0.0
    %427 = vmatpush2.msra.mxu0 0.0
    %428 = vmatprep.mubr.f32.mxu0 0.0
    %429 = vmatmul.mubr.f32.gmra.mxu0 %v362
    %v430 = vpop.f32.mrf.mxu0
    %v431 = vadd.f32 0.0, %v430
    %v432 = vpop.f32.mrf.mxu0
    %433 = vdwg.mxu0
    %435 = vrot.lane.b32.xlu0 %v348, 96
    %v436 = vpop.permute.xlu0 %435
    %v437 = vsel %vm110, %v436, 0
    %439 = vmatprep.subr.mxu0 0.0
    %440 = vmatpush1.msra.mxu0 0.0
    %441 = vmatprep.subr.mxu0 0.0
    %442 = vmatpush1.msra.mxu0 0.0
    %443 = vmatprep.subr.mxu0 0.0
    %444 = vmatpush1.msra.mxu0 0.0
    %445 = vmatprep.subr.mxu0 0.0
    %446 = vmatpush1.msra.mxu0 0.0
    %447 = vmatprep.subr.mxu0 0.0
    %448 = vmatpush1.msra.mxu0 0.0
    %449 = vmatprep.subr.mxu0 0.0
    %450 = vmatpush1.msra.mxu0 0.0
    %451 = vmatprep.subr.mxu0 0.0
    %452 = vmatpush1.msra.mxu0 0.0
    %453 = vmatprep.subr.mxu0 0.0
    %454 = vmatpush1.msra.mxu0 0.0
    %455 = vmatprep.subr.mxu0 0.0
    %456 = vmatpush1.msra.mxu0 0.0
    %457 = vmatprep.subr.mxu0 0.0
    %458 = vmatpush1.msra.mxu0 0.0
    %459 = vmatprep.subr.mxu0 0.0
    %460 = vmatpush1.msra.mxu0 0.0
    %461 = vmatprep.subr.mxu0 0.0
    %462 = vmatpush1.msra.mxu0 0.0
    %463 = vmatprep.subr.mxu0 0.0
    %464 = vmatpush1.msra.mxu0 %v352
    %465 = vmatprep.subr.mxu0 0.0
    %466 = vmatpush1.msra.mxu0 %v351
    %467 = vmatprep.subr.mxu0 0.0
    %468 = vmatpush1.msra.mxu0 %v350
    %469 = vmatprep.subr.mxu0 0.0
    %470 = vmatpush1.msra.mxu0 %v349
    %471 = vmatprep.subr.mxu0 0.0
    %472 = vmatpush2.msra.mxu0 0.0
    %473 = vmatprep.subr.mxu0 0.0
    %474 = vmatpush2.msra.mxu0 0.0
    %475 = vmatprep.subr.mxu0 0.0
    %476 = vmatpush2.msra.mxu0 0.0
    %477 = vmatprep.subr.mxu0 0.0
    %478 = vmatpush2.msra.mxu0 0.0
    %479 = vmatprep.subr.mxu0 0.0
    %480 = vmatpush2.msra.mxu0 0.0
    %481 = vmatprep.subr.mxu0 0.0
    %482 = vmatpush2.msra.mxu0 0.0
    %483 = vmatprep.subr.mxu0 0.0
    %484 = vmatpush2.msra.mxu0 0.0
    %485 = vmatprep.subr.mxu0 0.0
    %486 = vmatpush2.msra.mxu0 0.0
    %487 = vmatprep.subr.mxu0 0.0
    %488 = vmatpush2.msra.mxu0 0.0
    %489 = vmatprep.subr.mxu0 0.0
    %490 = vmatpush2.msra.mxu0 0.0
    %491 = vmatprep.subr.mxu0 0.0
    %492 = vmatpush2.msra.mxu0 0.0
    %493 = vmatprep.subr.mxu0 0.0
    %494 = vmatpush2.msra.mxu0 0.0
    %495 = vmatprep.subr.mxu0 0.0
    %496 = vmatpush2.msra.mxu0 0.0
    %497 = vmatprep.subr.mxu0 0.0
    %498 = vmatpush2.msra.mxu0 0.0
    %499 = vmatprep.subr.mxu0 0.0
    %500 = vmatpush2.msra.mxu0 0.0
    %501 = vmatprep.subr.mxu0 0.0
    %502 = vmatpush2.msra.mxu0 0.0
    %503 = vmatprep.mubr.f32.mxu0 0.0
    %504 = vmatmul.mubr.f32.gmra.mxu0 %v437
    %v505 = vpop.f32.mrf.mxu0
    %v506 = vadd.f32 %v431, %v505
    %v507 = vpop.f32.mrf.mxu0
    %508 = vdwg.mxu0
    %v509 = vld [vmem:[%s7] sm:$0x1]
    %v510 = vadd.f32 %v506, %v509
    %v511 = vxor.u32 %v510, 2147483648
    %v512 = vmul.f32 %v511, 1.442695
    %v513 = vpow.pop %v512
    %v514 = vadd.f32 %v513, 1.0
    %v515 = vrcp.pop %v514
    %v516 = vmul.f32 1.0, %v515
    %vm517 = vcmask 253952
    %518 = vst.msk [vmem:[#allocation15] sm:$0x1] %vm517, %v516
    // Predicated region
    $region57: #{tpu_custom_call.1} parent=1 // pred_check
      _
    $region58: #{tpu_custom_call.1} parent=1 // pred_check_branch
      %520 = sbr.rel (0) target = $region60
    $region59: #{tpu_custom_call.1} parent=1 // pred_region
      %s522 = ssub.s32 16, 16
      %523 = vsyncadd [#allocation8], %s522
      %s525 = sshll.u32 [#allocation15], 4
      %s526 = int_to_ptr.vmem [resolvable:$true] %s525
      %528 = dma.vmem_to_hbm [thread:$0]  %s526, 16, %s8, [#allocation8]
    $region60: #{tpu_custom_call.1} parent=1 // pred_fallthru
      _
    // Predicated region
    $region61: #{tpu_custom_call.1} parent=1 // pred_check
      _
    $region62: #{tpu_custom_call.1} parent=1 // pred_check_branch
      %530 = sbr.rel (0) target = $region64
    $region63: #{tpu_custom_call.1} parent=1 // pred_region
      %531 = dma.done [#allocation8], 16
    $region64: #{tpu_custom_call.1} parent=1 // pred_fallthru
      _
    %532 = vsyncpa [#allocation7], 1
    %533 = vsyncpa [#allocation10], 1
    %534 = vsyncpa [#allocation13], 1
    %535 = vsyncpa [#allocation8], 1

</llo_original>
